<compile_context>
chip_gen: v7x
topology: tpu7x:2x2x1
jax: 0.10.0
libtpu: 0.0.40
codegen_flags: <defaults>
</compile_context>

<pallas_src>
import math
from functools import partial

import jax
import jax.numpy as jnp
from jax import lax
from jax.experimental import pallas as pl
from jax.experimental.pallas import tpu as pltpu

BN_EPS = 1e-5
KPAD = 16          # per-branch im2col patch length, 9/15 zero-padded to 16
N_BRANCH = 3       # conv1(hrt), conv2(hrt+kv0), conv2(hrt+kv1)  (arity == 4)


def _kg_kernel(p_ref, w_ref, fw_ref, out_ref, sum_ref, sq_ref, *,
               n_rows, tb, w_out):
    """Fused conv(im2col) + BatchNorm(batch stats) + ReLU + 3-way min + FCN.

    p_ref  : (3, KPAD, TB*W) bf16  lane-dense patches, lane = w*TB + b_local
    w_ref  : (3, F, KPAD)    bf16  per-branch conv weights (K zero padded)
    fw_ref : (W, F, 1)       f32   f_FCN_net weight; fw_ref[w] is an (F, 1) col
    out_ref: (1, TB)         f32   lane-dense per-batch scores
    sum_ref/sq_ref: (3, F, 1) f32  per-branch per-channel batch sums (scratch)
    """
    phase = pl.program_id(0)   # 0: accumulate BN stats, 1: normalize + score
    tile = pl.program_id(1)

    @pl.when(jnp.logical_and(phase == 0, tile == 0))
    def _init():
        sum_ref[...] = jnp.zeros_like(sum_ref)
        sq_ref[...] = jnp.zeros_like(sq_ref)

    @pl.when(phase == 0)
    def _stats():
        for br in range(N_BRANCH):
            h = jnp.dot(w_ref[br], p_ref[br],
                        preferred_element_type=jnp.float32)          # (F, TB*W)
            sum_ref[br] = sum_ref[br] + jnp.sum(h, axis=1, keepdims=True)
            sq_ref[br] = sq_ref[br] + jnp.sum(h * h, axis=1, keepdims=True)

    @pl.when(phase == 1)
    def _score():
        inv_n = 1.0 / float(n_rows)
        m = None
        for br in range(N_BRANCH):
            h = jnp.dot(w_ref[br], p_ref[br],
                        preferred_element_type=jnp.float32)          # (F, TB*W)
            mean = sum_ref[br] * inv_n                                # (F, 1)
            # TODO(synk): single-pass variance (E[x^2]-mean^2) can lose
            # precision for very large batches; clamped to stay non-negative.
            var = jnp.maximum(sq_ref[br] * inv_n - mean * mean, 0.0)
            inv = lax.rsqrt(var + BN_EPS)
            y = jnp.maximum((h - mean) * inv, 0.0)                    # BN + ReLU
            m = y if m is None else jnp.minimum(m, y)                 # 3-way min

        # score_b = sum_{f,w} m[f, w*TB+b] * FW[f, w]:
        # static, lane-aligned segment slices fused with the FCN-weight FMA,
        # then one sublane reduction -> whole (1, TB) row in one shot.
        fw = fw_ref[...]                                              # (W, F, 1)
        acc = jnp.zeros((m.shape[0], tb), jnp.float32)
        for w in range(w_out):
            acc = acc + m[:, w * tb:(w + 1) * tb] * fw[w]             # (F, TB)
        out_ref[...] = jnp.sum(acc, axis=0, keepdims=True)            # (1, TB)


def _im2col(x, kh, kw):
    # x: (B, kh, E) single-channel image; conv output height is 1.
    B, H, E = x.shape
    Wo = E - kw + 1
    cols = []
    for i in range(kh):
        for j in range(kw):
            cols.append(x[:, i, j:j + Wo])        # (B, Wo)
    return jnp.stack(cols, axis=-1)               # (B, Wo, kh*kw), index i*kw+j


def _pick_batch_tile(B, W, F, budget_bytes=30 * 1024 * 1024):
    # Phase-1 keeps a few (F, TB*W) f32 temporaries live in VMEM; size the
    # batch tile so ~4 of them plus double-buffered bf16 patches fit the
    # budget.  Multi-tile runs need TB % 128 == 0 so patch lanes and the
    # (1, TB) output block stay 128-lane aligned; otherwise fall back to a
    # single tile (block == full array, no alignment constraint).
    f_pad = ((F + 7) // 8) * 8
    per_row = 4 * f_pad * W * 4 + 2 * N_BRANCH * KPAD * W * 2
    cap = min(4096, budget_bytes // max(per_row, 1))
    cap = (cap // 128) * 128
    for tb in range(cap, 0, -128):
        if B % tb == 0:
            return tb
    return B


def init_params(key, n_rel_keys, num_values, E, F):
    ks = jax.random.split(key, 5)
    bound = math.sqrt(1.0 / E)
    emb_rel = jax.random.uniform(ks[0], (n_rel_keys, E), jnp.float32, -bound, bound)
    emb_rel = emb_rel.at[0].set(0.0)              # padding_idx=0
    emb_ent = jax.random.uniform(ks[1], (num_values, E), jnp.float32, -bound, bound)
    emb_ent = emb_ent.at[0].set(0.0)
    # truncated_normal_(std=0.1) approximated with a clipped normal
    conv1_w = jnp.clip(jax.random.normal(ks[2], (F, 1, 3, 3), jnp.float32), -2, 2) * 0.1
    conv2_w = jnp.clip(jax.random.normal(ks[3], (F, 1, 5, 3), jnp.float32), -2, 2) * 0.1
    W = E - 2
    # xavier_normal_ for Linear(F*(E-2), 1); conv biases are zero-init and
    # cancelled by BatchNorm batch stats, so they are not kept.
    fcn_w = jax.random.normal(ks[4], (1, F * W), jnp.float32) * math.sqrt(2.0 / (F * W + 1))
    return dict(emb_rel=emb_rel, emb_ent=emb_ent,
                conv1_w=conv1_w, conv2_w=conv2_w,
                fcn_w=fcn_w, fcn_b=jnp.zeros((), jnp.float32))


def kg_forward(params, x_batch, arity, E, F):
    assert arity == 4, "kernel is wired for arity == 4 (three conv branches)"
    B = x_batch.shape[0]
    W = E - 2

    # ---- embedding lookups / concat / im2col (glue, plain XLA) ----
    rel_ids = x_batch[:, 0::2][:, 0:2].reshape(-1)
    ht_ids = x_batch[:, 1::2][:, 0:2].reshape(-1)
    rel_emb = params['emb_rel'][rel_ids].reshape(B, 2, E)
    ht_emb = params['emb_ent'][ht_ids].reshape(B, 2, E)
    hrt = jnp.stack([ht_emb[:, 0], rel_emb[:, 0], ht_emb[:, 1]], axis=1)          # (B,3,E)

    kv_key_ids = x_batch[:, 0::2][:, 2:].reshape(-1)
    kv_val_ids = x_batch[:, 1::2][:, 2:].reshape(-1)
    kv_key_emb = params['emb_rel'][kv_key_ids].reshape(B, arity - 2, E)
    kv_val_emb = params['emb_ent'][kv_val_ids].reshape(B, arity - 2, E)
    hrt_kv0 = jnp.concatenate([hrt, kv_key_emb[:, 0:1], kv_val_emb[:, 0:1]], 1)   # (B,5,E)
    hrt_kv1 = jnp.concatenate([hrt, kv_key_emb[:, 1:2], kv_val_emb[:, 1:2]], 1)   # (B,5,E)

    TB = _pick_batch_tile(B, W, F)
    NT = B // TB

    # Lane-dense patches: (KPAD, B*W) bf16, lane = (t*W + w)*TB + b_local.
    def prep(img, kh):
        p = _im2col(img, kh, 3)                                   # (B, W, kh*3)
        p = jnp.pad(p, ((0, 0), (0, 0), (0, KPAD - p.shape[-1])))
        p = p.reshape(NT, TB, W, KPAD)
        p = jnp.transpose(p, (3, 0, 2, 1))                        # (KPAD, NT, W, TB)
        return p.reshape(KPAD, NT * W * TB)

    p_all = jnp.stack([prep(hrt, 3), prep(hrt_kv0, 5), prep(hrt_kv1, 5)],
                      axis=0).astype(jnp.bfloat16)                # (3, KPAD, B*W)
    # TODO(synk): patches/weights feed the MXU in bf16 (reference convolves in
    # f32); accumulation stays f32.

    # per-branch conv weights (3, F, KPAD); conv biases dropped (BN cancels).
    # TODO(synk): a block-diagonal fused (3F, 48) weight would cut MXU pushes
    # further on v5e; kept as three dots for simplicity.
    w1 = params['conv1_w'].reshape(F, 9)
    w2 = params['conv2_w'].reshape(F, 15)
    w_all = jnp.stack([jnp.pad(w1, ((0, 0), (0, KPAD - 9))),
                       jnp.pad(w2, ((0, 0), (0, KPAD - 15))),
                       jnp.pad(w2, ((0, 0), (0, KPAD - 15)))],
                      axis=0).astype(jnp.bfloat16)

    # f_FCN_net weight: torch flatten order of (B, F, 1, W) is f*W + w.
    # Stored as (W, F, 1) so fw_ref[w] is directly an (F, 1) broadcast column.
    fw3 = params['fcn_w'].reshape(F, W).T[:, :, None].astype(jnp.float32)

    kernel = partial(_kg_kernel, n_rows=B * W, tb=TB, w_out=W)
    scores = pl.pallas_call(
        kernel,
        out_shape=jax.ShapeDtypeStruct((1, B), jnp.float32),
        grid_spec=pltpu.PrefetchScalarGridSpec(
            num_scalar_prefetch=0,
            grid=(2, NT),                                 # (phase, batch tile)
            in_specs=[
                pl.BlockSpec((N_BRANCH, KPAD, TB * W), lambda ph, t: (0, 0, t)),
                pl.BlockSpec((N_BRANCH, F, KPAD), lambda ph, t: (0, 0, 0)),
                pl.BlockSpec((W, F, 1), lambda ph, t: (0, 0, 0)),
            ],
            out_specs=pl.BlockSpec((1, TB), lambda ph, t: (0, t)),
            scratch_shapes=[pltpu.VMEM((N_BRANCH, F, 1), jnp.float32),
                            pltpu.VMEM((N_BRANCH, F, 1), jnp.float32)],
        ),
        compiler_params=pltpu.CompilerParams(
            dimension_semantics=("arbitrary", "arbitrary"),
            vmem_limit_bytes=48 * 1024 * 1024),
    )(p_all, w_all, fw3)

    # scalar FCN bias added on the host; reshape to the PyTorch (B, 1) layout
    score = (scores + params['fcn_b']).reshape(B, 1)

    # trained_emb bookkeeping kept OFF the hot path: device arrays only; the
    # Python dict can be built lazily via materialize_trained_emb().
    length = ht_ids.shape[0] // 2
    trained_emb = {
        'entity_ids': jnp.concatenate([ht_ids[:length], kv_val_ids[:length]]),
        'entity_embs': jnp.concatenate([params['emb_ent'][ht_ids[:length]],
                                        params['emb_ent'][kv_val_ids[:length]]],
                                       axis=0),
    }
    return score, trained_emb


def materialize_trained_emb(trained_emb):
    ids = [int(i) for i in jax.device_get(trained_emb['entity_ids'])]
    embs = [list(map(float, r)) for r in jax.device_get(trained_emb['entity_embs'])]
    return dict(zip(ids, embs))


if __name__ == "__main__":
    B, E, F = 2, 16, 8           # batch, embedding_size, num_filters (small)
    arity = 4
    n_rel_keys, num_values = 10, 20

    key = jax.random.PRNGKey(0)
    pkey, xk, xv = jax.random.split(key, 3)
    params = init_params(pkey, n_rel_keys, num_values, E, F)

    keys_cols = jax.random.randint(xk, (B, arity), 1, n_rel_keys)
    vals_cols = jax.random.randint(xv, (B, arity), 1, num_values)
    x_batch = jnp.zeros((B, 2 * arity), jnp.int32)
    x_batch = x_batch.at[:, 0::2].set(keys_cols)   # relation / key ids
    x_batch = x_batch.at[:, 1::2].set(vals_cols)   # entity / value ids

    score, trained_emb = kg_forward(params, x_batch, arity, E, F)
    jax.block_until_ready(score)
    _ = materialize_trained_emb(trained_emb)       # lazy, off the hot path
    print("KERNEL_OK")
</pallas_src>

<mosaic_0001>
module attributes {stable_mosaic.version = 11 : i64} {
  func.func @_kg_kernel(%arg0: i32, %arg1: i32, %arg2: memref<3x16x28xbf16, #tpu.memory_space<vmem>>, %arg3: memref<3x8x16xbf16, #tpu.memory_space<vmem>>, %arg4: memref<14x8x1xf32, #tpu.memory_space<vmem>>, %arg5: memref<1x2xf32, #tpu.memory_space<vmem>>, %arg6: memref<3x8x1xf32, #tpu.memory_space<vmem>>, %arg7: memref<3x8x1xf32, #tpu.memory_space<vmem>>) attributes {dimension_semantics = [#tpu.dimension_semantics<arbitrary>, #tpu.dimension_semantics<arbitrary>], iteration_bounds = array<i64: 2, 1>, scalar_prefetch = 0 : i64, scratch_operands = 2 : i64, tpu.core_type = #tpu.core_type<tc>, window_params = [{transform_indices = @transform_0, window_bounds = array<i64: 3, 16, 28>}, {pipeline_mode = #tpu.pipeline_mode<synchronous>, transform_indices = @transform_1, window_bounds = array<i64: 3, 8, 16>}, {pipeline_mode = #tpu.pipeline_mode<synchronous>, transform_indices = @transform_2, window_bounds = array<i64: 14, 8, 1>}, {transform_indices = @transform_3, window_bounds = array<i64: 1, 2>}]} {
    %c0_i32 = arith.constant 0 : i32
    %0 = arith.cmpi eq, %arg0, %c0_i32 : i32
    %c0_i32_0 = arith.constant 0 : i32
    %1 = arith.cmpi eq, %arg1, %c0_i32_0 : i32
    %2 = arith.andi %0, %1 : i1
    %3 = arith.extui %2 : i1 to i32
    %c0_i32_1 = arith.constant 0 : i32
    %4 = arith.cmpi ne, %3, %c0_i32_1 : i32
    scf.if %4 {
      %cst = arith.constant 0.000000e+00 : f32
      %11 = vector.broadcast %cst : f32 to vector<3x8x1xf32>
      %c0 = arith.constant 0 : index
      %c0_5 = arith.constant 0 : index
      %c0_6 = arith.constant 0 : index
      %12 = vector.load %arg6[%c0, %c0_5, %c0_6] : memref<3x8x1xf32, #tpu.memory_space<vmem>>, vector<3x8x1xf32>
      tpu.vector_store %arg6[%c0, %c0_5, %c0_6], %11 {strides = array<i32>} : memref<3x8x1xf32, #tpu.memory_space<vmem>>, vector<3x8x1xf32>,
      %cst_7 = arith.constant 0.000000e+00 : f32
      %13 = vector.broadcast %cst_7 : f32 to vector<3x8x1xf32>
      %c0_8 = arith.constant 0 : index
      %c0_9 = arith.constant 0 : index
      %c0_10 = arith.constant 0 : index
      %14 = vector.load %arg7[%c0_8, %c0_9, %c0_10] : memref<3x8x1xf32, #tpu.memory_space<vmem>>, vector<3x8x1xf32>
      tpu.vector_store %arg7[%c0_8, %c0_9, %c0_10], %13 {strides = array<i32>} : memref<3x8x1xf32, #tpu.memory_space<vmem>>, vector<3x8x1xf32>,
    } else {
    }
    %c0_i32_2 = arith.constant 0 : i32
    %5 = arith.cmpi eq, %arg0, %c0_i32_2 : i32
    %6 = arith.extui %5 : i1 to i32
    %c0_i32_3 = arith.constant 0 : i32
    %7 = arith.cmpi ne, %6, %c0_i32_3 : i32
    scf.if %7 {
      %c0 = arith.constant 0 : index
      %c0_5 = arith.constant 0 : index
      %c0_6 = arith.constant 0 : index
      %11 = vector.load %arg3[%c0, %c0_5, %c0_6] : memref<3x8x16xbf16, #tpu.memory_space<vmem>>, vector<1x8x16xbf16>
      %12 = vector.shape_cast %11 : vector<1x8x16xbf16> to vector<8x16xbf16>
      %c0_7 = arith.constant 0 : index
      %c0_8 = arith.constant 0 : index
      %c0_9 = arith.constant 0 : index
      %13 = vector.load %arg2[%c0_7, %c0_8, %c0_9] : memref<3x16x28xbf16, #tpu.memory_space<vmem>>, vector<1x16x28xbf16>
      %14 = vector.shape_cast %13 : vector<1x16x28xbf16> to vector<16x28xbf16>
      %cst = arith.constant dense<0.000000e+00> : vector<8x28xf32>
      %15 = tpu.matmul %12, %14, %cst {dimension_numbers = #tpu.dot_dimension_numbers<[1], [0], [0], [1], [0, 0, 1, 1], [], []>} : vector<8x16xbf16>, vector<16x28xbf16>, vector<8x28xf32> -> vector<8x28xf32>
      %c0_10 = arith.constant 0 : index
      %c0_11 = arith.constant 0 : index
      %c0_12 = arith.constant 0 : index
      %16 = vector.load %arg6[%c0_10, %c0_11, %c0_12] : memref<3x8x1xf32, #tpu.memory_space<vmem>>, vector<1x8x1xf32>
      %17 = vector.shape_cast %16 : vector<1x8x1xf32> to vector<8x1xf32>
      %cst_13 = arith.constant dense<0.000000e+00> : vector<8xf32>
      %18 = vector.multi_reduction <add>, %15, %cst_13 [1] : vector<8x28xf32> to vector<8xf32>
      %19 = vector.shape_cast %18 : vector<8xf32> to vector<8x1xf32>
      %20 = arith.addf %17, %19 : vector<8x1xf32>
      %c0_14 = arith.constant 0 : index
      %c0_15 = arith.constant 0 : index
      %c0_16 = arith.constant 0 : index
      %21 = vector.load %arg6[%c0_14, %c0_15, %c0_16] : memref<3x8x1xf32, #tpu.memory_space<vmem>>, vector<1x8x1xf32>
      %22 = vector.shape_cast %21 : vector<1x8x1xf32> to vector<8x1xf32>
      %23 = vector.shape_cast %20 : vector<8x1xf32> to vector<1x8x1xf32>
      tpu.vector_store %arg6[%c0_14, %c0_15, %c0_16], %23 {strides = array<i32>} : memref<3x8x1xf32, #tpu.memory_space<vmem>>, vector<1x8x1xf32>,
      %c0_17 = arith.constant 0 : index
      %c0_18 = arith.constant 0 : index
      %c0_19 = arith.constant 0 : index
      %24 = vector.load %arg7[%c0_17, %c0_18, %c0_19] : memref<3x8x1xf32, #tpu.memory_space<vmem>>, vector<1x8x1xf32>
      %25 = vector.shape_cast %24 : vector<1x8x1xf32> to vector<8x1xf32>
      %26 = arith.mulf %15, %15 : vector<8x28xf32>
      %cst_20 = arith.constant dense<0.000000e+00> : vector<8xf32>
      %27 = vector.multi_reduction <add>, %26, %cst_20 [1] : vector<8x28xf32> to vector<8xf32>
      %28 = vector.shape_cast %27 : vector<8xf32> to vector<8x1xf32>
      %29 = arith.addf %25, %28 : vector<8x1xf32>
      %c0_21 = arith.constant 0 : index
      %c0_22 = arith.constant 0 : index
      %c0_23 = arith.constant 0 : index
      %30 = vector.load %arg7[%c0_21, %c0_22, %c0_23] : memref<3x8x1xf32, #tpu.memory_space<vmem>>, vector<1x8x1xf32>
      %31 = vector.shape_cast %30 : vector<1x8x1xf32> to vector<8x1xf32>
      %32 = vector.shape_cast %29 : vector<8x1xf32> to vector<1x8x1xf32>
      tpu.vector_store %arg7[%c0_21, %c0_22, %c0_23], %32 {strides = array<i32>} : memref<3x8x1xf32, #tpu.memory_space<vmem>>, vector<1x8x1xf32>,
      %c1 = arith.constant 1 : index
      %c0_24 = arith.constant 0 : index
      %c0_25 = arith.constant 0 : index
      %33 = vector.load %arg3[%c1, %c0_24, %c0_25] : memref<3x8x16xbf16, #tpu.memory_space<vmem>>, vector<1x8x16xbf16>
      %34 = vector.shape_cast %33 : vector<1x8x16xbf16> to vector<8x16xbf16>
      %c1_26 = arith.constant 1 : index
      %c0_27 = arith.constant 0 : index
      %c0_28 = arith.constant 0 : index
      %35 = vector.load %arg2[%c1_26, %c0_27, %c0_28] : memref<3x16x28xbf16, #tpu.memory_space<vmem>>, vector<1x16x28xbf16>
      %36 = vector.shape_cast %35 : vector<1x16x28xbf16> to vector<16x28xbf16>
      %cst_29 = arith.constant dense<0.000000e+00> : vector<8x28xf32>
      %37 = tpu.matmul %34, %36, %cst_29 {dimension_numbers = #tpu.dot_dimension_numbers<[1], [0], [0], [1], [0, 0, 1, 1], [], []>} : vector<8x16xbf16>, vector<16x28xbf16>, vector<8x28xf32> -> vector<8x28xf32>
      %c1_30 = arith.constant 1 : index
      %c0_31 = arith.constant 0 : index
      %c0_32 = arith.constant 0 : index
      %38 = vector.load %arg6[%c1_30, %c0_31, %c0_32] : memref<3x8x1xf32, #tpu.memory_space<vmem>>, vector<1x8x1xf32>
      %39 = vector.shape_cast %38 : vector<1x8x1xf32> to vector<8x1xf32>
      %cst_33 = arith.constant dense<0.000000e+00> : vector<8xf32>
      %40 = vector.multi_reduction <add>, %37, %cst_33 [1] : vector<8x28xf32> to vector<8xf32>
      %41 = vector.shape_cast %40 : vector<8xf32> to vector<8x1xf32>
      %42 = arith.addf %39, %41 : vector<8x1xf32>
      %c1_34 = arith.constant 1 : index
      %c0_35 = arith.constant 0 : index
      %c0_36 = arith.constant 0 : index
      %43 = vector.load %arg6[%c1_34, %c0_35, %c0_36] : memref<3x8x1xf32, #tpu.memory_space<vmem>>, vector<1x8x1xf32>
      %44 = vector.shape_cast %43 : vector<1x8x1xf32> to vector<8x1xf32>
      %45 = vector.shape_cast %42 : vector<8x1xf32> to vector<1x8x1xf32>
      tpu.vector_store %arg6[%c1_34, %c0_35, %c0_36], %45 {strides = array<i32>} : memref<3x8x1xf32, #tpu.memory_space<vmem>>, vector<1x8x1xf32>,
      %c1_37 = arith.constant 1 : index
      %c0_38 = arith.constant 0 : index
      %c0_39 = arith.constant 0 : index
      %46 = vector.load %arg7[%c1_37, %c0_38, %c0_39] : memref<3x8x1xf32, #tpu.memory_space<vmem>>, vector<1x8x1xf32>
      %47 = vector.shape_cast %46 : vector<1x8x1xf32> to vector<8x1xf32>
      %48 = arith.mulf %37, %37 : vector<8x28xf32>
      %cst_40 = arith.constant dense<0.000000e+00> : vector<8xf32>
      %49 = vector.multi_reduction <add>, %48, %cst_40 [1] : vector<8x28xf32> to vector<8xf32>
      %50 = vector.shape_cast %49 : vector<8xf32> to vector<8x1xf32>
      %51 = arith.addf %47, %50 : vector<8x1xf32>
      %c1_41 = arith.constant 1 : index
      %c0_42 = arith.constant 0 : index
      %c0_43 = arith.constant 0 : index
      %52 = vector.load %arg7[%c1_41, %c0_42, %c0_43] : memref<3x8x1xf32, #tpu.memory_space<vmem>>, vector<1x8x1xf32>
      %53 = vector.shape_cast %52 : vector<1x8x1xf32> to vector<8x1xf32>
      %54 = vector.shape_cast %51 : vector<8x1xf32> to vector<1x8x1xf32>
      tpu.vector_store %arg7[%c1_41, %c0_42, %c0_43], %54 {strides = array<i32>} : memref<3x8x1xf32, #tpu.memory_space<vmem>>, vector<1x8x1xf32>,
      %c2 = arith.constant 2 : index
      %c0_44 = arith.constant 0 : index
      %c0_45 = arith.constant 0 : index
      %55 = vector.load %arg3[%c2, %c0_44, %c0_45] : memref<3x8x16xbf16, #tpu.memory_space<vmem>>, vector<1x8x16xbf16>
      %56 = vector.shape_cast %55 : vector<1x8x16xbf16> to vector<8x16xbf16>
      %c2_46 = arith.constant 2 : index
      %c0_47 = arith.constant 0 : index
      %c0_48 = arith.constant 0 : index
      %57 = vector.load %arg2[%c2_46, %c0_47, %c0_48] : memref<3x16x28xbf16, #tpu.memory_space<vmem>>, vector<1x16x28xbf16>
      %58 = vector.shape_cast %57 : vector<1x16x28xbf16> to vector<16x28xbf16>
      %cst_49 = arith.constant dense<0.000000e+00> : vector<8x28xf32>
      %59 = tpu.matmul %56, %58, %cst_49 {dimension_numbers = #tpu.dot_dimension_numbers<[1], [0], [0], [1], [0, 0, 1, 1], [], []>} : vector<8x16xbf16>, vector<16x28xbf16>, vector<8x28xf32> -> vector<8x28xf32>
      %c2_50 = arith.constant 2 : index
      %c0_51 = arith.constant 0 : index
      %c0_52 = arith.constant 0 : index
      %60 = vector.load %arg6[%c2_50, %c0_51, %c0_52] : memref<3x8x1xf32, #tpu.memory_space<vmem>>, vector<1x8x1xf32>
      %61 = vector.shape_cast %60 : vector<1x8x1xf32> to vector<8x1xf32>
      %cst_53 = arith.constant dense<0.000000e+00> : vector<8xf32>
      %62 = vector.multi_reduction <add>, %59, %cst_53 [1] : vector<8x28xf32> to vector<8xf32>
      %63 = vector.shape_cast %62 : vector<8xf32> to vector<8x1xf32>
      %64 = arith.addf %61, %63 : vector<8x1xf32>
      %c2_54 = arith.constant 2 : index
      %c0_55 = arith.constant 0 : index
      %c0_56 = arith.constant 0 : index
      %65 = vector.load %arg6[%c2_54, %c0_55, %c0_56] : memref<3x8x1xf32, #tpu.memory_space<vmem>>, vector<1x8x1xf32>
      %66 = vector.shape_cast %65 : vector<1x8x1xf32> to vector<8x1xf32>
      %67 = vector.shape_cast %64 : vector<8x1xf32> to vector<1x8x1xf32>
      tpu.vector_store %arg6[%c2_54, %c0_55, %c0_56], %67 {strides = array<i32>} : memref<3x8x1xf32, #tpu.memory_space<vmem>>, vector<1x8x1xf32>,
      %c2_57 = arith.constant 2 : index
      %c0_58 = arith.constant 0 : index
      %c0_59 = arith.constant 0 : index
      %68 = vector.load %arg7[%c2_57, %c0_58, %c0_59] : memref<3x8x1xf32, #tpu.memory_space<vmem>>, vector<1x8x1xf32>
      %69 = vector.shape_cast %68 : vector<1x8x1xf32> to vector<8x1xf32>
      %70 = arith.mulf %59, %59 : vector<8x28xf32>
      %cst_60 = arith.constant dense<0.000000e+00> : vector<8xf32>
      %71 = vector.multi_reduction <add>, %70, %cst_60 [1] : vector<8x28xf32> to vector<8xf32>
      %72 = vector.shape_cast %71 : vector<8xf32> to vector<8x1xf32>
      %73 = arith.addf %69, %72 : vector<8x1xf32>
      %c2_61 = arith.constant 2 : index
      %c0_62 = arith.constant 0 : index
      %c0_63 = arith.constant 0 : index
      %74 = vector.load %arg7[%c2_61, %c0_62, %c0_63] : memref<3x8x1xf32, #tpu.memory_space<vmem>>, vector<1x8x1xf32>
      %75 = vector.shape_cast %74 : vector<1x8x1xf32> to vector<8x1xf32>
      %76 = vector.shape_cast %73 : vector<8x1xf32> to vector<1x8x1xf32>
      tpu.vector_store %arg7[%c2_61, %c0_62, %c0_63], %76 {strides = array<i32>} : memref<3x8x1xf32, #tpu.memory_space<vmem>>, vector<1x8x1xf32>,
    } else {
    }
    %c1_i32 = arith.constant 1 : i32
    %8 = arith.cmpi eq, %arg0, %c1_i32 : i32
    %9 = arith.extui %8 : i1 to i32
    %c0_i32_4 = arith.constant 0 : i32
    %10 = arith.cmpi ne, %9, %c0_i32_4 : i32
    scf.if %10 {
      %c0 = arith.constant 0 : index
      %c0_5 = arith.constant 0 : index
      %c0_6 = arith.constant 0 : index
      %11 = vector.load %arg3[%c0, %c0_5, %c0_6] : memref<3x8x16xbf16, #tpu.memory_space<vmem>>, vector<1x8x16xbf16>
      %12 = vector.shape_cast %11 : vector<1x8x16xbf16> to vector<8x16xbf16>
      %c0_7 = arith.constant 0 : index
      %c0_8 = arith.constant 0 : index
      %c0_9 = arith.constant 0 : index
      %13 = vector.load %arg2[%c0_7, %c0_8, %c0_9] : memref<3x16x28xbf16, #tpu.memory_space<vmem>>, vector<1x16x28xbf16>
      %14 = vector.shape_cast %13 : vector<1x16x28xbf16> to vector<16x28xbf16>
      %cst = arith.constant dense<0.000000e+00> : vector<8x28xf32>
      %15 = tpu.matmul %12, %14, %cst {dimension_numbers = #tpu.dot_dimension_numbers<[1], [0], [0], [1], [0, 0, 1, 1], [], []>} : vector<8x16xbf16>, vector<16x28xbf16>, vector<8x28xf32> -> vector<8x28xf32>
      %c0_10 = arith.constant 0 : index
      %c0_11 = arith.constant 0 : index
      %c0_12 = arith.constant 0 : index
      %16 = vector.load %arg6[%c0_10, %c0_11, %c0_12] : memref<3x8x1xf32, #tpu.memory_space<vmem>>, vector<1x8x1xf32>
      %17 = vector.shape_cast %16 : vector<1x8x1xf32> to vector<8x1xf32>
      %cst_13 = arith.constant 0.0357142873 : f32
      %18 = vector.broadcast %cst_13 : f32 to vector<8x1xf32>
      %19 = arith.mulf %17, %18 : vector<8x1xf32>
      %c0_14 = arith.constant 0 : index
      %c0_15 = arith.constant 0 : index
      %c0_16 = arith.constant 0 : index
      %20 = vector.load %arg7[%c0_14, %c0_15, %c0_16] : memref<3x8x1xf32, #tpu.memory_space<vmem>>, vector<1x8x1xf32>
      %21 = vector.shape_cast %20 : vector<1x8x1xf32> to vector<8x1xf32>
      %cst_17 = arith.constant 0.0357142873 : f32
      %22 = vector.broadcast %cst_17 : f32 to vector<8x1xf32>
      %23 = arith.mulf %21, %22 : vector<8x1xf32>
      %24 = arith.mulf %19, %19 : vector<8x1xf32>
      %25 = arith.subf %23, %24 : vector<8x1xf32>
      %cst_18 = arith.constant 0.000000e+00 : f32
      %26 = vector.broadcast %cst_18 : f32 to vector<8x1xf32>
      %27 = arith.maximumf %25, %26 : vector<8x1xf32>
      %cst_19 = arith.constant 9.99999974E-6 : f32
      %28 = vector.broadcast %cst_19 : f32 to vector<8x1xf32>
      %29 = arith.addf %27, %28 : vector<8x1xf32>
      %30 = math.rsqrt %29 : vector<8x1xf32>
      %31 = vector.broadcast %19 : vector<8x1xf32> to vector<8x28xf32>
      %32 = arith.subf %15, %31 : vector<8x28xf32>
      %33 = vector.broadcast %30 : vector<8x1xf32> to vector<8x28xf32>
      %34 = arith.mulf %32, %33 : vector<8x28xf32>
      %cst_20 = arith.constant 0.000000e+00 : f32
      %35 = vector.broadcast %cst_20 : f32 to vector<8x28xf32>
      %36 = arith.maximumf %34, %35 : vector<8x28xf32>
      %c1 = arith.constant 1 : index
      %c0_21 = arith.constant 0 : index
      %c0_22 = arith.constant 0 : index
      %37 = vector.load %arg3[%c1, %c0_21, %c0_22] : memref<3x8x16xbf16, #tpu.memory_space<vmem>>, vector<1x8x16xbf16>
      %38 = vector.shape_cast %37 : vector<1x8x16xbf16> to vector<8x16xbf16>
      %c1_23 = arith.constant 1 : index
      %c0_24 = arith.constant 0 : index
      %c0_25 = arith.constant 0 : index
      %39 = vector.load %arg2[%c1_23, %c0_24, %c0_25] : memref<3x16x28xbf16, #tpu.memory_space<vmem>>, vector<1x16x28xbf16>
      %40 = vector.shape_cast %39 : vector<1x16x28xbf16> to vector<16x28xbf16>
      %cst_26 = arith.constant dense<0.000000e+00> : vector<8x28xf32>
      %41 = tpu.matmul %38, %40, %cst_26 {dimension_numbers = #tpu.dot_dimension_numbers<[1], [0], [0], [1], [0, 0, 1, 1], [], []>} : vector<8x16xbf16>, vector<16x28xbf16>, vector<8x28xf32> -> vector<8x28xf32>
      %c1_27 = arith.constant 1 : index
      %c0_28 = arith.constant 0 : index
      %c0_29 = arith.constant 0 : index
      %42 = vector.load %arg6[%c1_27, %c0_28, %c0_29] : memref<3x8x1xf32, #tpu.memory_space<vmem>>, vector<1x8x1xf32>
      %43 = vector.shape_cast %42 : vector<1x8x1xf32> to vector<8x1xf32>
      %cst_30 = arith.constant 0.0357142873 : f32
      %44 = vector.broadcast %cst_30 : f32 to vector<8x1xf32>
      %45 = arith.mulf %43, %44 : vector<8x1xf32>
      %c1_31 = arith.constant 1 : index
      %c0_32 = arith.constant 0 : index
      %c0_33 = arith.constant 0 : index
      %46 = vector.load %arg7[%c1_31, %c0_32, %c0_33] : memref<3x8x1xf32, #tpu.memory_space<vmem>>, vector<1x8x1xf32>
      %47 = vector.shape_cast %46 : vector<1x8x1xf32> to vector<8x1xf32>
      %cst_34 = arith.constant 0.0357142873 : f32
      %48 = vector.broadcast %cst_34 : f32 to vector<8x1xf32>
      %49 = arith.mulf %47, %48 : vector<8x1xf32>
      %50 = arith.mulf %45, %45 : vector<8x1xf32>
      %51 = arith.subf %49, %50 : vector<8x1xf32>
      %cst_35 = arith.constant 0.000000e+00 : f32
      %52 = vector.broadcast %cst_35 : f32 to vector<8x1xf32>
      %53 = arith.maximumf %51, %52 : vector<8x1xf32>
      %cst_36 = arith.constant 9.99999974E-6 : f32
      %54 = vector.broadcast %cst_36 : f32 to vector<8x1xf32>
      %55 = arith.addf %53, %54 : vector<8x1xf32>
      %56 = math.rsqrt %55 : vector<8x1xf32>
      %57 = vector.broadcast %45 : vector<8x1xf32> to vector<8x28xf32>
      %58 = arith.subf %41, %57 : vector<8x28xf32>
      %59 = vector.broadcast %56 : vector<8x1xf32> to vector<8x28xf32>
      %60 = arith.mulf %58, %59 : vector<8x28xf32>
      %cst_37 = arith.constant 0.000000e+00 : f32
      %61 = vector.broadcast %cst_37 : f32 to vector<8x28xf32>
      %62 = arith.maximumf %60, %61 : vector<8x28xf32>
      %63 = arith.minimumf %36, %62 : vector<8x28xf32>
      %c2 = arith.constant 2 : index
      %c0_38 = arith.constant 0 : index
      %c0_39 = arith.constant 0 : index
      %64 = vector.load %arg3[%c2, %c0_38, %c0_39] : memref<3x8x16xbf16, #tpu.memory_space<vmem>>, vector<1x8x16xbf16>
      %65 = vector.shape_cast %64 : vector<1x8x16xbf16> to vector<8x16xbf16>
      %c2_40 = arith.constant 2 : index
      %c0_41 = arith.constant 0 : index
      %c0_42 = arith.constant 0 : index
      %66 = vector.load %arg2[%c2_40, %c0_41, %c0_42] : memref<3x16x28xbf16, #tpu.memory_space<vmem>>, vector<1x16x28xbf16>
      %67 = vector.shape_cast %66 : vector<1x16x28xbf16> to vector<16x28xbf16>
      %cst_43 = arith.constant dense<0.000000e+00> : vector<8x28xf32>
      %68 = tpu.matmul %65, %67, %cst_43 {dimension_numbers = #tpu.dot_dimension_numbers<[1], [0], [0], [1], [0, 0, 1, 1], [], []>} : vector<8x16xbf16>, vector<16x28xbf16>, vector<8x28xf32> -> vector<8x28xf32>
      %c2_44 = arith.constant 2 : index
      %c0_45 = arith.constant 0 : index
      %c0_46 = arith.constant 0 : index
      %69 = vector.load %arg6[%c2_44, %c0_45, %c0_46] : memref<3x8x1xf32, #tpu.memory_space<vmem>>, vector<1x8x1xf32>
      %70 = vector.shape_cast %69 : vector<1x8x1xf32> to vector<8x1xf32>
      %cst_47 = arith.constant 0.0357142873 : f32
      %71 = vector.broadcast %cst_47 : f32 to vector<8x1xf32>
      %72 = arith.mulf %70, %71 : vector<8x1xf32>
      %c2_48 = arith.constant 2 : index
      %c0_49 = arith.constant 0 : index
      %c0_50 = arith.constant 0 : index
      %73 = vector.load %arg7[%c2_48, %c0_49, %c0_50] : memref<3x8x1xf32, #tpu.memory_space<vmem>>, vector<1x8x1xf32>
      %74 = vector.shape_cast %73 : vector<1x8x1xf32> to vector<8x1xf32>
      %cst_51 = arith.constant 0.0357142873 : f32
      %75 = vector.broadcast %cst_51 : f32 to vector<8x1xf32>
      %76 = arith.mulf %74, %75 : vector<8x1xf32>
      %77 = arith.mulf %72, %72 : vector<8x1xf32>
      %78 = arith.subf %76, %77 : vector<8x1xf32>
      %cst_52 = arith.constant 0.000000e+00 : f32
      %79 = vector.broadcast %cst_52 : f32 to vector<8x1xf32>
      %80 = arith.maximumf %78, %79 : vector<8x1xf32>
      %cst_53 = arith.constant 9.99999974E-6 : f32
      %81 = vector.broadcast %cst_53 : f32 to vector<8x1xf32>
      %82 = arith.addf %80, %81 : vector<8x1xf32>
      %83 = math.rsqrt %82 : vector<8x1xf32>
      %84 = vector.broadcast %72 : vector<8x1xf32> to vector<8x28xf32>
      %85 = arith.subf %68, %84 : vector<8x28xf32>
      %86 = vector.broadcast %83 : vector<8x1xf32> to vector<8x28xf32>
      %87 = arith.mulf %85, %86 : vector<8x28xf32>
      %cst_54 = arith.constant 0.000000e+00 : f32
      %88 = vector.broadcast %cst_54 : f32 to vector<8x28xf32>
      %89 = arith.maximumf %87, %88 : vector<8x28xf32>
      %90 = arith.minimumf %63, %89 : vector<8x28xf32>
      %c0_55 = arith.constant 0 : index
      %c0_56 = arith.constant 0 : index
      %c0_57 = arith.constant 0 : index
      %91 = vector.load %arg4[%c0_55, %c0_56, %c0_57] : memref<14x8x1xf32, #tpu.memory_space<vmem>>, vector<14x8x1xf32>
      %cst_58 = arith.constant 0.000000e+00 : f32
      %92 = vector.broadcast %cst_58 : f32 to vector<8x2xf32>
      %93 = vector.extract_strided_slice %90 {offsets = [0, 0], sizes = [8, 2], strides = [1, 1]} : vector<8x28xf32> to vector<8x2xf32>
      %94 = vector.extract_strided_slice %91 {offsets = [0, 0, 0], sizes = [1, 8, 1], strides = [1, 1, 1]} : vector<14x8x1xf32> to vector<1x8x1xf32>
      %95 = vector.shape_cast %94 : vector<1x8x1xf32> to vector<8x1xf32>
      %96 = vector.broadcast %95 : vector<8x1xf32> to vector<8x2xf32>
      %97 = arith.mulf %93, %96 : vector<8x2xf32>
      %98 = arith.addf %92, %97 : vector<8x2xf32>
      %99 = vector.extract_strided_slice %90 {offsets = [0, 2], sizes = [8, 2], strides = [1, 1]} : vector<8x28xf32> to vector<8x2xf32>
      %100 = vector.extract_strided_slice %91 {offsets = [1, 0, 0], sizes = [1, 8, 1], strides = [1, 1, 1]} : vector<14x8x1xf32> to vector<1x8x1xf32>
      %101 = vector.shape_cast %100 : vector<1x8x1xf32> to vector<8x1xf32>
      %102 = vector.broadcast %101 : vector<8x1xf32> to vector<8x2xf32>
      %103 = arith.mulf %99, %102 : vector<8x2xf32>
      %104 = arith.addf %98, %103 : vector<8x2xf32>
      %105 = vector.extract_strided_slice %90 {offsets = [0, 4], sizes = [8, 2], strides = [1, 1]} : vector<8x28xf32> to vector<8x2xf32>
      %106 = vector.extract_strided_slice %91 {offsets = [2, 0, 0], sizes = [1, 8, 1], strides = [1, 1, 1]} : vector<14x8x1xf32> to vector<1x8x1xf32>
      %107 = vector.shape_cast %106 : vector<1x8x1xf32> to vector<8x1xf32>
      %108 = vector.broadcast %107 : vector<8x1xf32> to vector<8x2xf32>
      %109 = arith.mulf %105, %108 : vector<8x2xf32>
      %110 = arith.addf %104, %109 : vector<8x2xf32>
      %111 = vector.extract_strided_slice %90 {offsets = [0, 6], sizes = [8, 2], strides = [1, 1]} : vector<8x28xf32> to vector<8x2xf32>
      %112 = vector.extract_strided_slice %91 {offsets = [3, 0, 0], sizes = [1, 8, 1], strides = [1, 1, 1]} : vector<14x8x1xf32> to vector<1x8x1xf32>
      %113 = vector.shape_cast %112 : vector<1x8x1xf32> to vector<8x1xf32>
      %114 = vector.broadcast %113 : vector<8x1xf32> to vector<8x2xf32>
      %115 = arith.mulf %111, %114 : vector<8x2xf32>
      %116 = arith.addf %110, %115 : vector<8x2xf32>
      %117 = vector.extract_strided_slice %90 {offsets = [0, 8], sizes = [8, 2], strides = [1, 1]} : vector<8x28xf32> to vector<8x2xf32>
      %118 = vector.extract_strided_slice %91 {offsets = [4, 0, 0], sizes = [1, 8, 1], strides = [1, 1, 1]} : vector<14x8x1xf32> to vector<1x8x1xf32>
      %119 = vector.shape_cast %118 : vector<1x8x1xf32> to vector<8x1xf32>
      %120 = vector.broadcast %119 : vector<8x1xf32> to vector<8x2xf32>
      %121 = arith.mulf %117, %120 : vector<8x2xf32>
      %122 = arith.addf %116, %121 : vector<8x2xf32>
      %123 = vector.extract_strided_slice %90 {offsets = [0, 10], sizes = [8, 2], strides = [1, 1]} : vector<8x28xf32> to vector<8x2xf32>
      %124 = vector.extract_strided_slice %91 {offsets = [5, 0, 0], sizes = [1, 8, 1], strides = [1, 1, 1]} : vector<14x8x1xf32> to vector<1x8x1xf32>
      %125 = vector.shape_cast %124 : vector<1x8x1xf32> to vector<8x1xf32>
      %126 = vector.broadcast %125 : vector<8x1xf32> to vector<8x2xf32>
      %127 = arith.mulf %123, %126 : vector<8x2xf32>
      %128 = arith.addf %122, %127 : vector<8x2xf32>
      %129 = vector.extract_strided_slice %90 {offsets = [0, 12], sizes = [8, 2], strides = [1, 1]} : vector<8x28xf32> to vector<8x2xf32>
      %130 = vector.extract_strided_slice %91 {offsets = [6, 0, 0], sizes = [1, 8, 1], strides = [1, 1, 1]} : vector<14x8x1xf32> to vector<1x8x1xf32>
      %131 = vector.shape_cast %130 : vector<1x8x1xf32> to vector<8x1xf32>
      %132 = vector.broadcast %131 : vector<8x1xf32> to vector<8x2xf32>
      %133 = arith.mulf %129, %132 : vector<8x2xf32>
      %134 = arith.addf %128, %133 : vector<8x2xf32>
      %135 = vector.extract_strided_slice %90 {offsets = [0, 14], sizes = [8, 2], strides = [1, 1]} : vector<8x28xf32> to vector<8x2xf32>
      %136 = vector.extract_strided_slice %91 {offsets = [7, 0, 0], sizes = [1, 8, 1], strides = [1, 1, 1]} : vector<14x8x1xf32> to vector<1x8x1xf32>
      %137 = vector.shape_cast %136 : vector<1x8x1xf32> to vector<8x1xf32>
      %138 = vector.broadcast %137 : vector<8x1xf32> to vector<8x2xf32>
      %139 = arith.mulf %135, %138 : vector<8x2xf32>
      %140 = arith.addf %134, %139 : vector<8x2xf32>
      %141 = vector.extract_strided_slice %90 {offsets = [0, 16], sizes = [8, 2], strides = [1, 1]} : vector<8x28xf32> to vector<8x2xf32>
      %142 = vector.extract_strided_slice %91 {offsets = [8, 0, 0], sizes = [1, 8, 1], strides = [1, 1, 1]} : vector<14x8x1xf32> to vector<1x8x1xf32>
      %143 = vector.shape_cast %142 : vector<1x8x1xf32> to vector<8x1xf32>
      %144 = vector.broadcast %143 : vector<8x1xf32> to vector<8x2xf32>
      %145 = arith.mulf %141, %144 : vector<8x2xf32>
      %146 = arith.addf %140, %145 : vector<8x2xf32>
      %147 = vector.extract_strided_slice %90 {offsets = [0, 18], sizes = [8, 2], strides = [1, 1]} : vector<8x28xf32> to vector<8x2xf32>
      %148 = vector.extract_strided_slice %91 {offsets = [9, 0, 0], sizes = [1, 8, 1], strides = [1, 1, 1]} : vector<14x8x1xf32> to vector<1x8x1xf32>
      %149 = vector.shape_cast %148 : vector<1x8x1xf32> to vector<8x1xf32>
      %150 = vector.broadcast %149 : vector<8x1xf32> to vector<8x2xf32>
      %151 = arith.mulf %147, %150 : vector<8x2xf32>
      %152 = arith.addf %146, %151 : vector<8x2xf32>
      %153 = vector.extract_strided_slice %90 {offsets = [0, 20], sizes = [8, 2], strides = [1, 1]} : vector<8x28xf32> to vector<8x2xf32>
      %154 = vector.extract_strided_slice %91 {offsets = [10, 0, 0], sizes = [1, 8, 1], strides = [1, 1, 1]} : vector<14x8x1xf32> to vector<1x8x1xf32>
      %155 = vector.shape_cast %154 : vector<1x8x1xf32> to vector<8x1xf32>
      %156 = vector.broadcast %155 : vector<8x1xf32> to vector<8x2xf32>
      %157 = arith.mulf %153, %156 : vector<8x2xf32>
      %158 = arith.addf %152, %157 : vector<8x2xf32>
      %159 = vector.extract_strided_slice %90 {offsets = [0, 22], sizes = [8, 2], strides = [1, 1]} : vector<8x28xf32> to vector<8x2xf32>
      %160 = vector.extract_strided_slice %91 {offsets = [11, 0, 0], sizes = [1, 8, 1], strides = [1, 1, 1]} : vector<14x8x1xf32> to vector<1x8x1xf32>
      %161 = vector.shape_cast %160 : vector<1x8x1xf32> to vector<8x1xf32>
      %162 = vector.broadcast %161 : vector<8x1xf32> to vector<8x2xf32>
      %163 = arith.mulf %159, %162 : vector<8x2xf32>
      %164 = arith.addf %158, %163 : vector<8x2xf32>
      %165 = vector.extract_strided_slice %90 {offsets = [0, 24], sizes = [8, 2], strides = [1, 1]} : vector<8x28xf32> to vector<8x2xf32>
      %166 = vector.extract_strided_slice %91 {offsets = [12, 0, 0], sizes = [1, 8, 1], strides = [1, 1, 1]} : vector<14x8x1xf32> to vector<1x8x1xf32>
      %167 = vector.shape_cast %166 : vector<1x8x1xf32> to vector<8x1xf32>
      %168 = vector.broadcast %167 : vector<8x1xf32> to vector<8x2xf32>
      %169 = arith.mulf %165, %168 : vector<8x2xf32>
      %170 = arith.addf %164, %169 : vector<8x2xf32>
      %171 = vector.extract_strided_slice %90 {offsets = [0, 26], sizes = [8, 2], strides = [1, 1]} : vector<8x28xf32> to vector<8x2xf32>
      %172 = vector.extract_strided_slice %91 {offsets = [13, 0, 0], sizes = [1, 8, 1], strides = [1, 1, 1]} : vector<14x8x1xf32> to vector<1x8x1xf32>
      %173 = vector.shape_cast %172 : vector<1x8x1xf32> to vector<8x1xf32>
      %174 = vector.broadcast %173 : vector<8x1xf32> to vector<8x2xf32>
      %175 = arith.mulf %171, %174 : vector<8x2xf32>
      %176 = arith.addf %170, %175 : vector<8x2xf32>
      %cst_59 = arith.constant dense<0.000000e+00> : vector<2xf32>
      %177 = vector.multi_reduction <add>, %176, %cst_59 [0] : vector<8x2xf32> to vector<2xf32>
      %178 = vector.shape_cast %177 : vector<2xf32> to vector<1x2xf32>
      %c0_60 = arith.constant 0 : index
      %c0_61 = arith.constant 0 : index
      %179 = vector.load %arg5[%c0_60, %c0_61] : memref<1x2xf32, #tpu.memory_space<vmem>>, vector<1x2xf32>
      tpu.vector_store %arg5[%c0_60, %c0_61], %178 {strides = array<i32>} : memref<1x2xf32, #tpu.memory_space<vmem>>, vector<1x2xf32>,
    } else {
    }
    return
  }
  func.func @transform_0(%arg0: i32, %arg1: i32) -> (i32, i32, i32) {
    %c0_i32 = arith.constant 0 : i32
    %c0_i32_0 = arith.constant 0 : i32
    %c0_i32_1 = arith.constant 0 : i32
    return %c0_i32, %c0_i32_0, %arg1 : i32, i32, i32
  }
  func.func @transform_1(%arg0: i32, %arg1: i32) -> (i32, i32, i32) {
    %c0_i32 = arith.constant 0 : i32
    %c0_i32_0 = arith.constant 0 : i32
    %c0_i32_1 = arith.constant 0 : i32
    %c0_i32_2 = arith.constant 0 : i32
    return %c0_i32, %c0_i32_0, %c0_i32_1 : i32, i32, i32
  }
  func.func @transform_2(%arg0: i32, %arg1: i32) -> (i32, i32, i32) {
    %c0_i32 = arith.constant 0 : i32
    %c0_i32_0 = arith.constant 0 : i32
    %c0_i32_1 = arith.constant 0 : i32
    %c0_i32_2 = arith.constant 0 : i32
    return %c0_i32, %c0_i32_0, %c0_i32_1 : i32, i32, i32
  }
  func.func @transform_3(%arg0: i32, %arg1: i32) -> (i32, i32) {
    %c0_i32 = arith.constant 0 : i32
    %c0_i32_0 = arith.constant 0 : i32
    return %c0_i32, %arg1 : i32, i32
  }
}

</mosaic_0001>

<llo_original>
// kernel: tpu_custom_call.1
$region0: #{tpu_custom_call.1}
  #allocation0 [shape = 'u32[]', space=smem, size = 0x4, offset = 0x4, fixed_abs, tag = 'smem constant byte address 0x4 - core index']
  #allocation1 [shape = 'u32[144,128]{1,0:T(1,128)}', space=vmem, size = 0x12000, scoped, tag = 'internal scratch']
  #allocation2 [shape = 'f32[3,8,1]{2,1,0:T(8,128)}', space=vmem, size = 0x3000, scoped, tag = 'scratch operand']
  #allocation3 [shape = 'f32[3,8,1]{2,1,0:T(8,128)}', space=vmem, size = 0x3000, scoped, tag = 'scratch operand']
  %s0 = inlined_call_operand.vmem [shape: bf16[3,16,28], index: 0, kind: input, shape index: {}]
  %s1 = inlined_call_operand.vmem [shape: bf16[3,8,16], index: 1, kind: input, shape index: {}]
  %s2 = inlined_call_operand.vmem [shape: f32[14,8,1], index: 2, kind: input, shape index: {}]
  %s3 = inlined_call_operand.hbm [shape: f32[1,2], index: 3, kind: output, shape index: {}]
  %s4 = sld [smem:[#allocation0]]
  $region57: #{tpu_custom_call.1} parent=0
    _
  %s6 = ssub.s32 1, %s4
  %s7 = scalar_select 0, %s6, %s4
  $region1: #{tpu_custom_call.1} parent=0
    #allocation4 [shape = 'u8[512]{0}', space=vmem, size = 0x400, scoped, tag = 'output window, operand 0, single buffered']
    #allocation5 [shape = 's32[2]{0}', space=sflag, size = 0x8, scoped, tag = 'scoped memory for tpu_custom_call.1']
    %8 = vsyncpa [#allocation5], 0
    loop: start=0, step=1, limit=4
    $region2: #{tpu_custom_call.1} parent=1 // loop_pre_header
      _
    $region3: #{tpu_custom_call.1} parent=1 // loop_header
      %s10 = sphi 0, %s14
      %p11 = scmp.ge.s32.totalorder %s10, 4
      %s17 = sphi 0, %s29
      %s18 = sphi 0, %s25
      %s19 = sphi 0, %s17
      %s20 = sphi 0, %s18
      %s21 = sphi 0, %s19
      %s22 = sphi 0, %s20
      %s32 = sphi 0, %s34
      %s35 = sphi 0, %s32
      %s36 = sphi 0, %s35
      %s52 = sphi 0, %s36
      %s56 = sphi 0, %s56
      %s58 = sphi 0, %s56
      %s59 = sphi 0, %s58
      %s73 = sphi 0, %s59
      %s77 = sphi 0, %s77
      %s79 = sphi 0, %s77
      %s80 = sphi 0, %s79
      %s94 = sphi 0, %s80
      %s100 = sphi 0, %s102
      %s103 = sphi 0, %s100
      %s104 = sphi 0, %s103
      %s120 = sphi 0, %s104
    $region4: #{tpu_custom_call.1} parent=1 // loop_header_branch
      %13 = sbr.rel (%p11) target = $region8
    $region5: #{tpu_custom_call.1} parent=1 // loop_body
      %s15 = ssub.s32 %s10, 1
      %s16 = ssub.s32 %s10, 2
      %s23 = sadd.s32 1, %s18
      %p24 = scmp.ge.s32.totalorder %s23, 1
      %s25 = scalar_select %p24, 0, %s23
      %s26 = sadd.s32 1, %s17
      %s27 = scalar_select %p24, %s26, %s17
      %p28 = scmp.ge.s32.totalorder %s27, 2
      %s29 = scalar_select %p28, 0, %s27
      %s30 = ssub.s32 %s18, %s25
      %p31 = scmp.eq.s32.totalorder %s30, 0
      %s33 = sadd.s32 %s32, 1
      %s34 = scalar_select %p31, %s32, %s33
      %p37 = pneg %p31
      %p38 = scmp.eq.s32.totalorder %s10, 1
      %p39 = por %p37, %p38
      %p40 = scmp.ne.s32.totalorder %s32, %s35
      %p41 = scmp.eq.s32.totalorder %s10, 0
      %p42 = por %p40, %p41
      %p43 = scmp.ne.s32.totalorder %s32, %s35
      %p44 = scmp.eq.s32.totalorder %s15, 1
      %p45 = por %p43, %p44
      %p46 = scmp.ne.s32.totalorder %s35, %s36
      %p47 = scmp.eq.s32.totalorder %s15, 0
      %p48 = por %p46, %p47
      %p49 = scmp.ne.s32.totalorder %s35, %s36
      %p50 = scmp.eq.s32.totalorder %s16, 1
      %p51 = por %p49, %p50
      %p53 = scmp.ne.s32.totalorder %s36, %s52
      %p54 = scmp.eq.s32.totalorder %s16, 0
      %p55 = por %p53, %p54
      %s57 = sadd.s32 %s56, 1
      %p60 = scmp.eq.s32.totalorder %s10, 1
      %p61 = scmp.ne.s32.totalorder %s56, %s58
      %p62 = scmp.eq.s32.totalorder %s10, 0
      %p63 = por %p61, %p62
      %p64 = scmp.ne.s32.totalorder %s56, %s58
      %p65 = scmp.eq.s32.totalorder %s15, 1
      %p66 = por %p64, %p65
      %p67 = scmp.ne.s32.totalorder %s58, %s59
      %p68 = scmp.eq.s32.totalorder %s15, 0
      %p69 = por %p67, %p68
      %p70 = scmp.ne.s32.totalorder %s58, %s59
      %p71 = scmp.eq.s32.totalorder %s16, 1
      %p72 = por %p70, %p71
      %p74 = scmp.ne.s32.totalorder %s59, %s73
      %p75 = scmp.eq.s32.totalorder %s16, 0
      %p76 = por %p74, %p75
      %s78 = sadd.s32 %s77, 1
      %p81 = scmp.eq.s32.totalorder %s10, 1
      %p82 = scmp.ne.s32.totalorder %s77, %s79
      %p83 = scmp.eq.s32.totalorder %s10, 0
      %p84 = por %p82, %p83
      %p85 = scmp.ne.s32.totalorder %s77, %s79
      %p86 = scmp.eq.s32.totalorder %s15, 1
      %p87 = por %p85, %p86
      %p88 = scmp.ne.s32.totalorder %s79, %s80
      %p89 = scmp.eq.s32.totalorder %s15, 0
      %p90 = por %p88, %p89
      %p91 = scmp.ne.s32.totalorder %s79, %s80
      %p92 = scmp.eq.s32.totalorder %s16, 1
      %p93 = por %p91, %p92
      %p95 = scmp.ne.s32.totalorder %s80, %s94
      %p96 = scmp.eq.s32.totalorder %s16, 0
      %p97 = por %p95, %p96
      %s98 = ssub.s32 %s18, %s25
      %p99 = scmp.eq.s32.totalorder %s98, 0
      %s101 = sadd.s32 %s100, 1
      %s102 = scalar_select %p99, %s100, %s101
      %p105 = pneg %p99
      %p106 = scmp.eq.s32.totalorder %s10, 1
      %p107 = por %p105, %p106
      %p108 = scmp.ne.s32.totalorder %s100, %s103
      %p109 = scmp.eq.s32.totalorder %s10, 0
      %p110 = por %p108, %p109
      %p111 = scmp.ne.s32.totalorder %s100, %s103
      %p112 = scmp.eq.s32.totalorder %s15, 1
      %p113 = por %p111, %p112
      %p114 = scmp.ne.s32.totalorder %s103, %s104
      %p115 = scmp.eq.s32.totalorder %s15, 0
      %p116 = por %p114, %p115
      %p117 = scmp.ne.s32.totalorder %s103, %s104
      %p118 = scmp.eq.s32.totalorder %s16, 1
      %p119 = por %p117, %p118
      %p121 = scmp.ne.s32.totalorder %s104, %s120
      %p122 = scmp.eq.s32.totalorder %s16, 0
      %p123 = por %p121, %p122
      %p124 = scmp.le.s32.totalorder 1, %s10
      %p125 = scmp.lt.s32.totalorder %s10, 3
      %p126 = pnand %p124, %p125
      %p127 = pneg %p126
      // Predicated region
      $region9: #{tpu_custom_call.1} parent=5 // pred_check
        _
      $region10: #{tpu_custom_call.1} parent=5 // pred_check_branch
        %129 = sbr.rel (%p126) target = $region12
      $region11: #{tpu_custom_call.1} parent=5 // pred_region
        %s130 = ssub.s32 %s10, 1
        // Predicated region
        $region13: #{tpu_custom_call.1} parent=11 // pred_check
          %p131 = pneg %p48
        $region14: #{tpu_custom_call.1} parent=11 // pred_check_branch
          %133 = sbr.rel (%p131) target = $region16
        $region15: #{tpu_custom_call.1} parent=11 // pred_region
          %p134 = scmp.lt.s32.totalorder %s20, 0
          %s135 = scalar_select %p134, %s20, 0
          %s136 = smul.addr %s135, 4
          %s137 = scalar_lea.vmem %s0, %s136
        $region16: #{tpu_custom_call.1} parent=11 // pred_fallthru
          _
        // Predicated region
        $region17: #{tpu_custom_call.1} parent=11 // pred_check
          %p138 = pneg %p69
        $region18: #{tpu_custom_call.1} parent=11 // pred_check_branch
          %140 = sbr.rel (%p138) target = $region20
        $region19: #{tpu_custom_call.1} parent=11 // pred_region
          _
        $region20: #{tpu_custom_call.1} parent=11 // pred_fallthru
          _
        // Predicated region
        $region21: #{tpu_custom_call.1} parent=11 // pred_check
          %p141 = pneg %p90
        $region22: #{tpu_custom_call.1} parent=11 // pred_check_branch
          %143 = sbr.rel (%p141) target = $region24
        $region23: #{tpu_custom_call.1} parent=11 // pred_region
          _
        $region24: #{tpu_custom_call.1} parent=11 // pred_fallthru
          _
      $region12: #{tpu_custom_call.1} parent=5 // pred_fallthru
        _
      %p144 = scmp.lt.s32.totalorder %s10, 2
      // Predicated region
      $region25: #{tpu_custom_call.1} parent=5 // pred_check
        %p145 = pneg %p144
      $region26: #{tpu_custom_call.1} parent=5 // pred_check_branch
        %147 = sbr.rel (%p145) target = $region28
      $region27: #{tpu_custom_call.1} parent=5 // pred_region
        _
      $region28: #{tpu_custom_call.1} parent=5 // pred_fallthru
        _
      %p148 = scmp.le.s32.totalorder 1, %s10
      %p149 = scmp.lt.s32.totalorder %s10, 3
      %p150 = pnand %p148, %p149
      %p151 = pneg %p150
      // Predicated region
      $region29: #{tpu_custom_call.1} parent=5 // pred_check
        _
      $region30: #{tpu_custom_call.1} parent=5 // pred_check_branch
        %153 = sbr.rel (%p150) target = $region32
      $region31: #{tpu_custom_call.1} parent=5 // pred_region
        %s154 = ssub.s32 %s10, 1
        %p155 = scmp.lt.s32.totalorder %s20, 0
        %s156 = scalar_select %p155, %s20, 0
        %s157 = smul.addr %s156, 4
        %s158 = scalar_lea.vmem %s0, %s157
        %p159 = pneg %p48
        %p160 = pneg %p45
        %p161 = pneg %p69
        %p162 = pneg %p66
        %p163 = pneg %p90
        %p164 = pneg %p87
        %p165 = pneg %p116
        %p166 = pneg %p113
        %p167 = scmp.lt.s32.totalorder %s20, 0
        %s168 = scalar_select %p167, %s20, 0
        %s169 = smul.addr %s168, 4
        %s170 = scalar_lea.vmem %s0, %s169
        %p172 = scmp.eq.s32.totalorder %s19, 0
        %p173 = scmp.eq.s32.totalorder %s20, 0
        %p174 = pnand %p172, %p173
        %p175 = pneg %p174
        // Predicated region
        $region33: #{tpu_custom_call.1} parent=31 // pred_check
          _
        $region34: #{tpu_custom_call.1} parent=31 // pred_check_branch
          %177 = sbr.rel (%p174) target = $region36
        $region35: #{tpu_custom_call.1} parent=31 // pred_region
          %vm178 = vcmask 7168
          %179 = vst.msk [vmem:[#allocation2] sm:$0xff] %vm178, 0.0
          %180 = vst.msk [vmem:[#allocation2 + $0x8] sm:$0xff] %vm178, 0.0
          %181 = vst.msk [vmem:[#allocation2 + $0x10] sm:$0xff] %vm178, 0.0
          %182 = vst.msk [vmem:[#allocation3] sm:$0xff] %vm178, 0.0
          %183 = vst.msk [vmem:[#allocation3 + $0x8] sm:$0xff] %vm178, 0.0
          %184 = vst.msk [vmem:[#allocation3 + $0x10] sm:$0xff] %vm178, 0.0
        $region36: #{tpu_custom_call.1} parent=31 // pred_fallthru
          _
        // Predicated region
        $region37: #{tpu_custom_call.1} parent=31 // pred_check
          %p185 = pneg %p172
        $region38: #{tpu_custom_call.1} parent=31 // pred_check_branch
          %187 = sbr.rel (%p185) target = $region40
        $region39: #{tpu_custom_call.1} parent=31 // pred_region
          %v188 = vld [vmem:[%s1] sm:$0xf]
          %v189 = vld [vmem:[%s170] sm:$0xf]
          %v190 = vld [vmem:[%s170 + $0x4] sm:$0xf]
          %v193 = vunpack.c.l.b16 %v189
          %v194 = vunpack.c.l.b16 %v190
          %v195 = vpack.c.b16 %v194, %v193
          %vm197 = vcmask 130048
          %v199 = vsel %vm197, %v188, 0
          %201 = vmatprep.subr.bf16.mxu0 0
          %202 = vmatpush1.bf16.msra.mxu0 %v195
          %203 = vmatprep.subr.bf16.mxu0 0
          %204 = vmatpush1.bf16.msra.mxu0 0
          %205 = vmatprep.subr.bf16.mxu0 0
          %206 = vmatpush1.bf16.msra.mxu0 0
          %207 = vmatprep.subr.bf16.mxu0 0
          %208 = vmatpush1.bf16.msra.mxu0 0
          %209 = vmatprep.subr.bf16.mxu0 0
          %210 = vmatpush1.bf16.msra.mxu0 0
          %211 = vmatprep.subr.bf16.mxu0 0
          %212 = vmatpush1.bf16.msra.mxu0 0
          %213 = vmatprep.subr.bf16.mxu0 0
          %214 = vmatpush1.bf16.msra.mxu0 0
          %215 = vmatprep.subr.bf16.mxu0 0
          %216 = vmatpush1.bf16.msra.mxu0 0
          %217 = vmatprep.subr.bf16.mxu0 0
          %218 = vmatpush1.bf16.msra.mxu0 0
          %219 = vmatprep.subr.bf16.mxu0 0
          %220 = vmatpush1.bf16.msra.mxu0 0
          %221 = vmatprep.subr.bf16.mxu0 0
          %222 = vmatpush1.bf16.msra.mxu0 0
          %223 = vmatprep.subr.bf16.mxu0 0
          %224 = vmatpush1.bf16.msra.mxu0 0
          %225 = vmatprep.subr.bf16.mxu0 0
          %226 = vmatpush1.bf16.msra.mxu0 0
          %227 = vmatprep.subr.bf16.mxu0 0
          %228 = vmatpush1.bf16.msra.mxu0 0
          %229 = vmatprep.subr.bf16.mxu0 0
          %230 = vmatpush1.bf16.msra.mxu0 0
          %231 = vmatprep.subr.bf16.mxu0 0
          %232 = vmatpush1.bf16.msra.mxu0 0
          %233 = vmatprep.mubr.bf16.mxu0 0
          %234 = vmatmul.mubr.bf16.gmra.mrb[0].mxu0 %v199
          %v235 = vpop.f32.mrb[0].mxu0
          %v236 = vadd.f32 0.0, %v235
          %v237 = vpop.f32.mrb[0].mxu0
          %v238 = vpop.f32.mrb[0].mxu0
          %v239 = vpop.f32.mrb[0].mxu0
          %240 = vdwg.mxu0
          %v241 = vld [vmem:[#allocation2] sm:$0xff]
          %vm242 = vcmask 228352
          %v243 = vsel %vm242, %v236, 0.0
          %244 = vadd.xlane.f32.xlu0 %v243
          %v245 = vpop.xlane.xlu0 %244
          %v246 = vadd.f32 %v241, %v245
          %vm247 = vcmask 7168
          %248 = vst.msk [vmem:[#allocation2] sm:$0xff] %vm247, %v246
          %v249 = vld [vmem:[#allocation3] sm:$0xff]
          %v250 = vmul.f32 %v236, %v236
          %v251 = vsel %vm242, %v250, 0.0
          %252 = vadd.xlane.f32.xlu0 %v251
          %v253 = vpop.xlane.xlu0 %252
          %v254 = vadd.f32 %v249, %v253
          %255 = vst.msk [vmem:[#allocation3] sm:$0xff] %vm247, %v254
          %s256 = scalar_lea.vmem %s1, 4
          %v257 = vld [vmem:[%s256] sm:$0xf]
          %s258 = scalar_lea.vmem %s170, 8
          %v259 = vld [vmem:[%s258] sm:$0xf]
          %v260 = vld [vmem:[%s258 + $0x4] sm:$0xf]
          %v263 = vunpack.c.l.b16 %v259
          %v264 = vunpack.c.l.b16 %v260
          %v265 = vpack.c.b16 %v264, %v263
          %v268 = vsel %vm197, %v257, 0
          %270 = vmatprep.subr.bf16.mxu0 0
          %271 = vmatpush1.bf16.msra.mxu0 %v265
          %272 = vmatprep.subr.bf16.mxu0 0
          %273 = vmatpush1.bf16.msra.mxu0 0
          %274 = vmatprep.subr.bf16.mxu0 0
          %275 = vmatpush1.bf16.msra.mxu0 0
          %276 = vmatprep.subr.bf16.mxu0 0
          %277 = vmatpush1.bf16.msra.mxu0 0
          %278 = vmatprep.subr.bf16.mxu0 0
          %279 = vmatpush1.bf16.msra.mxu0 0
          %280 = vmatprep.subr.bf16.mxu0 0
          %281 = vmatpush1.bf16.msra.mxu0 0
          %282 = vmatprep.subr.bf16.mxu0 0
          %283 = vmatpush1.bf16.msra.mxu0 0
          %284 = vmatprep.subr.bf16.mxu0 0
          %285 = vmatpush1.bf16.msra.mxu0 0
          %286 = vmatprep.subr.bf16.mxu0 0
          %287 = vmatpush1.bf16.msra.mxu0 0
          %288 = vmatprep.subr.bf16.mxu0 0
          %289 = vmatpush1.bf16.msra.mxu0 0
          %290 = vmatprep.subr.bf16.mxu0 0
          %291 = vmatpush1.bf16.msra.mxu0 0
          %292 = vmatprep.subr.bf16.mxu0 0
          %293 = vmatpush1.bf16.msra.mxu0 0
          %294 = vmatprep.subr.bf16.mxu0 0
          %295 = vmatpush1.bf16.msra.mxu0 0
          %296 = vmatprep.subr.bf16.mxu0 0
          %297 = vmatpush1.bf16.msra.mxu0 0
          %298 = vmatprep.subr.bf16.mxu0 0
          %299 = vmatpush1.bf16.msra.mxu0 0
          %300 = vmatprep.subr.bf16.mxu0 0
          %301 = vmatpush1.bf16.msra.mxu0 0
          %302 = vmatprep.mubr.bf16.mxu0 0
          %303 = vmatmul.mubr.bf16.gmra.mrb[0].mxu0 %v268
          %v304 = vpop.f32.mrb[0].mxu0
          %v305 = vadd.f32 0.0, %v304
          %v306 = vpop.f32.mrb[0].mxu0
          %v307 = vpop.f32.mrb[0].mxu0
          %v308 = vpop.f32.mrb[0].mxu0
          %309 = vdwg.mxu0
          %s310 = scalar_lea.vmem [#allocation2], 8
          %v311 = vld [vmem:[%s310] sm:$0xff]
          %v312 = vsel %vm242, %v305, 0.0
          %313 = vadd.xlane.f32.xlu0 %v312
          %v314 = vpop.xlane.xlu0 %313
          %v315 = vadd.f32 %v311, %v314
          %316 = vst.msk [vmem:[%s310] sm:$0xff] %vm247, %v315
          %s317 = scalar_lea.vmem [#allocation3], 8
          %v318 = vld [vmem:[%s317] sm:$0xff]
          %v319 = vmul.f32 %v305, %v305
          %v320 = vsel %vm242, %v319, 0.0
          %321 = vadd.xlane.f32.xlu0 %v320
          %v322 = vpop.xlane.xlu0 %321
          %v323 = vadd.f32 %v318, %v322
          %324 = vst.msk [vmem:[%s317] sm:$0xff] %vm247, %v323
          %s325 = scalar_lea.vmem %s1, 8
          %v326 = vld [vmem:[%s325] sm:$0xf]
          %s327 = scalar_lea.vmem %s170, 16
          %v328 = vld [vmem:[%s327] sm:$0xf]
          %v329 = vld [vmem:[%s327 + $0x4] sm:$0xf]
          %v332 = vunpack.c.l.b16 %v328
          %v333 = vunpack.c.l.b16 %v329
          %v334 = vpack.c.b16 %v333, %v332
          %v337 = vsel %vm197, %v326, 0
          %339 = vmatprep.subr.bf16.mxu0 0
          %340 = vmatpush1.bf16.msra.mxu0 %v334
          %341 = vmatprep.subr.bf16.mxu0 0
          %342 = vmatpush1.bf16.msra.mxu0 0
          %343 = vmatprep.subr.bf16.mxu0 0
          %344 = vmatpush1.bf16.msra.mxu0 0
          %345 = vmatprep.subr.bf16.mxu0 0
          %346 = vmatpush1.bf16.msra.mxu0 0
          %347 = vmatprep.subr.bf16.mxu0 0
          %348 = vmatpush1.bf16.msra.mxu0 0
          %349 = vmatprep.subr.bf16.mxu0 0
          %350 = vmatpush1.bf16.msra.mxu0 0
          %351 = vmatprep.subr.bf16.mxu0 0
          %352 = vmatpush1.bf16.msra.mxu0 0
          %353 = vmatprep.subr.bf16.mxu0 0
          %354 = vmatpush1.bf16.msra.mxu0 0
          %355 = vmatprep.subr.bf16.mxu0 0
          %356 = vmatpush1.bf16.msra.mxu0 0
          %357 = vmatprep.subr.bf16.mxu0 0
          %358 = vmatpush1.bf16.msra.mxu0 0
          %359 = vmatprep.subr.bf16.mxu0 0
          %360 = vmatpush1.bf16.msra.mxu0 0
          %361 = vmatprep.subr.bf16.mxu0 0
          %362 = vmatpush1.bf16.msra.mxu0 0
          %363 = vmatprep.subr.bf16.mxu0 0
          %364 = vmatpush1.bf16.msra.mxu0 0
          %365 = vmatprep.subr.bf16.mxu0 0
          %366 = vmatpush1.bf16.msra.mxu0 0
          %367 = vmatprep.subr.bf16.mxu0 0
          %368 = vmatpush1.bf16.msra.mxu0 0
          %369 = vmatprep.subr.bf16.mxu0 0
          %370 = vmatpush1.bf16.msra.mxu0 0
          %371 = vmatprep.mubr.bf16.mxu0 0
          %372 = vmatmul.mubr.bf16.gmra.mrb[0].mxu0 %v337
          %v373 = vpop.f32.mrb[0].mxu0
          %v374 = vadd.f32 0.0, %v373
          %v375 = vpop.f32.mrb[0].mxu0
          %v376 = vpop.f32.mrb[0].mxu0
          %v377 = vpop.f32.mrb[0].mxu0
          %378 = vdwg.mxu0
          %s379 = scalar_lea.vmem [#allocation2], 16
          %v380 = vld [vmem:[%s379] sm:$0xff]
          %v381 = vsel %vm242, %v374, 0.0
          %382 = vadd.xlane.f32.xlu0 %v381
          %v383 = vpop.xlane.xlu0 %382
          %v384 = vadd.f32 %v380, %v383
          %385 = vst.msk [vmem:[%s379] sm:$0xff] %vm247, %v384
          %s386 = scalar_lea.vmem [#allocation3], 16
          %v387 = vld [vmem:[%s386] sm:$0xff]
          %v388 = vmul.f32 %v374, %v374
          %v389 = vsel %vm242, %v388, 0.0
          %390 = vadd.xlane.f32.xlu0 %v389
          %v391 = vpop.xlane.xlu0 %390
          %v392 = vadd.f32 %v387, %v391
          %393 = vst.msk [vmem:[%s386] sm:$0xff] %vm247, %v392
        $region40: #{tpu_custom_call.1} parent=31 // pred_fallthru
          _
        %p394 = scmp.eq.s32.totalorder %s19, 1
        // Predicated region
        $region41: #{tpu_custom_call.1} parent=31 // pred_check
          %p395 = pneg %p394
        $region42: #{tpu_custom_call.1} parent=31 // pred_check_branch
          %397 = sbr.rel (%p395) target = $region44
        $region43: #{tpu_custom_call.1} parent=31 // pred_region
          %v398 = vld [vmem:[%s1] sm:$0xf]
          %v399 = vld [vmem:[%s170] sm:$0xf]
          %v400 = vld [vmem:[%s170 + $0x4] sm:$0xf]
          %v403 = vunpack.c.l.b16 %v399
          %v404 = vunpack.c.l.b16 %v400
          %v405 = vpack.c.b16 %v404, %v403
          %vm407 = vcmask 130048
          %v409 = vsel %vm407, %v398, 0
          %411 = vmatprep.subr.bf16.mxu0 0
          %412 = vmatpush1.bf16.msra.mxu0 %v405
          %413 = vmatprep.subr.bf16.mxu0 0
          %414 = vmatpush1.bf16.msra.mxu0 0
          %415 = vmatprep.subr.bf16.mxu0 0
          %416 = vmatpush1.bf16.msra.mxu0 0
          %417 = vmatprep.subr.bf16.mxu0 0
          %418 = vmatpush1.bf16.msra.mxu0 0
          %419 = vmatprep.subr.bf16.mxu0 0
          %420 = vmatpush1.bf16.msra.mxu0 0
          %421 = vmatprep.subr.bf16.mxu0 0
          %422 = vmatpush1.bf16.msra.mxu0 0
          %423 = vmatprep.subr.bf16.mxu0 0
          %424 = vmatpush1.bf16.msra.mxu0 0
          %425 = vmatprep.subr.bf16.mxu0 0
          %426 = vmatpush1.bf16.msra.mxu0 0
          %427 = vmatprep.subr.bf16.mxu0 0
          %428 = vmatpush1.bf16.msra.mxu0 0
          %429 = vmatprep.subr.bf16.mxu0 0
          %430 = vmatpush1.bf16.msra.mxu0 0
          %431 = vmatprep.subr.bf16.mxu0 0
          %432 = vmatpush1.bf16.msra.mxu0 0
          %433 = vmatprep.subr.bf16.mxu0 0
          %434 = vmatpush1.bf16.msra.mxu0 0
          %435 = vmatprep.subr.bf16.mxu0 0
          %436 = vmatpush1.bf16.msra.mxu0 0
          %437 = vmatprep.subr.bf16.mxu0 0
          %438 = vmatpush1.bf16.msra.mxu0 0
          %439 = vmatprep.subr.bf16.mxu0 0
          %440 = vmatpush1.bf16.msra.mxu0 0
          %441 = vmatprep.subr.bf16.mxu0 0
          %442 = vmatpush1.bf16.msra.mxu0 0
          %443 = vmatprep.mubr.bf16.mxu0 0
          %444 = vmatmul.mubr.bf16.gmra.mrb[0].mxu0 %v409
          %v445 = vpop.f32.mrb[0].mxu0
          %v446 = vadd.f32 0.0, %v445
          %v447 = vpop.f32.mrb[0].mxu0
          %v448 = vpop.f32.mrb[0].mxu0
          %v449 = vpop.f32.mrb[0].mxu0
          %450 = vdwg.mxu0
          %v451 = vld [vmem:[#allocation2] sm:$0xff]
          %v452 = vmul.f32 %v451, 0.035714287
          %v453 = vld [vmem:[#allocation3] sm:$0xff]
          %v454 = vmul.f32 %v453, 0.035714287
          %v455 = vmul.f32 %v452, %v452
          %v456 = vsub.f32 %v454, %v455
          %v457 = vmax.f32 %v456, 0.0
          %v458 = vadd.f32 %v457, 1e-05
          %v459 = vrsqrt.pop %v458
          %461 = vset.pattern.permute.xlu0 0
          %462 = vperm.xlu0 %461, %v452
          %v463 = vpop.permute.xlu0 %462
          %v465 = vsub.f32 %v446, %v463
          %467 = vset.pattern.permute.xlu0 0
          %468 = vperm.xlu0 %467, %v459
          %v469 = vpop.permute.xlu0 %468
          %v471 = vmul.f32 %v465, %v469
          %v472 = vmax.f32 %v471, 0.0
          %s473 = scalar_lea.vmem %s1, 4
          %v474 = vld [vmem:[%s473] sm:$0xf]
          %s475 = scalar_lea.vmem %s170, 8
          %v476 = vld [vmem:[%s475] sm:$0xf]
          %v477 = vld [vmem:[%s475 + $0x4] sm:$0xf]
          %v480 = vunpack.c.l.b16 %v476
          %v481 = vunpack.c.l.b16 %v477
          %v482 = vpack.c.b16 %v481, %v480
          %v485 = vsel %vm407, %v474, 0
          %487 = vmatprep.subr.bf16.mxu0 0
          %488 = vmatpush1.bf16.msra.mxu0 %v482
          %489 = vmatprep.subr.bf16.mxu0 0
          %490 = vmatpush1.bf16.msra.mxu0 0
          %491 = vmatprep.subr.bf16.mxu0 0
          %492 = vmatpush1.bf16.msra.mxu0 0
          %493 = vmatprep.subr.bf16.mxu0 0
          %494 = vmatpush1.bf16.msra.mxu0 0
          %495 = vmatprep.subr.bf16.mxu0 0
          %496 = vmatpush1.bf16.msra.mxu0 0
          %497 = vmatprep.subr.bf16.mxu0 0
          %498 = vmatpush1.bf16.msra.mxu0 0
          %499 = vmatprep.subr.bf16.mxu0 0
          %500 = vmatpush1.bf16.msra.mxu0 0
          %501 = vmatprep.subr.bf16.mxu0 0
          %502 = vmatpush1.bf16.msra.mxu0 0
          %503 = vmatprep.subr.bf16.mxu0 0
          %504 = vmatpush1.bf16.msra.mxu0 0
          %505 = vmatprep.subr.bf16.mxu0 0
          %506 = vmatpush1.bf16.msra.mxu0 0
          %507 = vmatprep.subr.bf16.mxu0 0
          %508 = vmatpush1.bf16.msra.mxu0 0
          %509 = vmatprep.subr.bf16.mxu0 0
          %510 = vmatpush1.bf16.msra.mxu0 0
          %511 = vmatprep.subr.bf16.mxu0 0
          %512 = vmatpush1.bf16.msra.mxu0 0
          %513 = vmatprep.subr.bf16.mxu0 0
          %514 = vmatpush1.bf16.msra.mxu0 0
          %515 = vmatprep.subr.bf16.mxu0 0
          %516 = vmatpush1.bf16.msra.mxu0 0
          %517 = vmatprep.subr.bf16.mxu0 0
          %518 = vmatpush1.bf16.msra.mxu0 0
          %519 = vmatprep.mubr.bf16.mxu0 0
          %520 = vmatmul.mubr.bf16.gmra.mrb[0].mxu0 %v485
          %v521 = vpop.f32.mrb[0].mxu0
          %v522 = vadd.f32 0.0, %v521
          %v523 = vpop.f32.mrb[0].mxu0
          %v524 = vpop.f32.mrb[0].mxu0
          %v525 = vpop.f32.mrb[0].mxu0
          %526 = vdwg.mxu0
          %s527 = scalar_lea.vmem [#allocation2], 8
          %v528 = vld [vmem:[%s527] sm:$0xff]
          %v529 = vmul.f32 %v528, 0.035714287
          %s530 = scalar_lea.vmem [#allocation3], 8
          %v531 = vld [vmem:[%s530] sm:$0xff]
          %v532 = vmul.f32 %v531, 0.035714287
          %v533 = vmul.f32 %v529, %v529
          %v534 = vsub.f32 %v532, %v533
          %v535 = vmax.f32 %v534, 0.0
          %v536 = vadd.f32 %v535, 1e-05
          %v537 = vrsqrt.pop %v536
          %539 = vset.pattern.permute.xlu0 0
          %540 = vperm.xlu0 %539, %v529
          %v541 = vpop.permute.xlu0 %540
          %v543 = vsub.f32 %v522, %v541
          %545 = vset.pattern.permute.xlu0 0
          %546 = vperm.xlu0 %545, %v537
          %v547 = vpop.permute.xlu0 %546
          %v549 = vmul.f32 %v543, %v547
          %v550 = vmax.f32 %v549, 0.0
          %v551 = vmin.f32 %v472, %v550
          %s552 = scalar_lea.vmem %s1, 8
          %v553 = vld [vmem:[%s552] sm:$0xf]
          %s554 = scalar_lea.vmem %s170, 16
          %v555 = vld [vmem:[%s554] sm:$0xf]
          %v556 = vld [vmem:[%s554 + $0x4] sm:$0xf]
          %v559 = vunpack.c.l.b16 %v555
          %v560 = vunpack.c.l.b16 %v556
          %v561 = vpack.c.b16 %v560, %v559
          %v564 = vsel %vm407, %v553, 0
          %566 = vmatprep.subr.bf16.mxu0 0
          %567 = vmatpush1.bf16.msra.mxu0 %v561
          %568 = vmatprep.subr.bf16.mxu0 0
          %569 = vmatpush1.bf16.msra.mxu0 0
          %570 = vmatprep.subr.bf16.mxu0 0
          %571 = vmatpush1.bf16.msra.mxu0 0
          %572 = vmatprep.subr.bf16.mxu0 0
          %573 = vmatpush1.bf16.msra.mxu0 0
          %574 = vmatprep.subr.bf16.mxu0 0
          %575 = vmatpush1.bf16.msra.mxu0 0
          %576 = vmatprep.subr.bf16.mxu0 0
          %577 = vmatpush1.bf16.msra.mxu0 0
          %578 = vmatprep.subr.bf16.mxu0 0
          %579 = vmatpush1.bf16.msra.mxu0 0
          %580 = vmatprep.subr.bf16.mxu0 0
          %581 = vmatpush1.bf16.msra.mxu0 0
          %582 = vmatprep.subr.bf16.mxu0 0
          %583 = vmatpush1.bf16.msra.mxu0 0
          %584 = vmatprep.subr.bf16.mxu0 0
          %585 = vmatpush1.bf16.msra.mxu0 0
          %586 = vmatprep.subr.bf16.mxu0 0
          %587 = vmatpush1.bf16.msra.mxu0 0
          %588 = vmatprep.subr.bf16.mxu0 0
          %589 = vmatpush1.bf16.msra.mxu0 0
          %590 = vmatprep.subr.bf16.mxu0 0
          %591 = vmatpush1.bf16.msra.mxu0 0
          %592 = vmatprep.subr.bf16.mxu0 0
          %593 = vmatpush1.bf16.msra.mxu0 0
          %594 = vmatprep.subr.bf16.mxu0 0
          %595 = vmatpush1.bf16.msra.mxu0 0
          %596 = vmatprep.subr.bf16.mxu0 0
          %597 = vmatpush1.bf16.msra.mxu0 0
          %598 = vmatprep.mubr.bf16.mxu0 0
          %599 = vmatmul.mubr.bf16.gmra.mrb[0].mxu0 %v564
          %v600 = vpop.f32.mrb[0].mxu0
          %v601 = vadd.f32 0.0, %v600
          %v602 = vpop.f32.mrb[0].mxu0
          %v603 = vpop.f32.mrb[0].mxu0
          %v604 = vpop.f32.mrb[0].mxu0
          %605 = vdwg.mxu0
          %s606 = scalar_lea.vmem [#allocation2], 16
          %v607 = vld [vmem:[%s606] sm:$0xff]
          %v608 = vmul.f32 %v607, 0.035714287
          %s609 = scalar_lea.vmem [#allocation3], 16
          %v610 = vld [vmem:[%s609] sm:$0xff]
          %v611 = vmul.f32 %v610, 0.035714287
          %v612 = vmul.f32 %v608, %v608
          %v613 = vsub.f32 %v611, %v612
          %v614 = vmax.f32 %v613, 0.0
          %v615 = vadd.f32 %v614, 1e-05
          %v616 = vrsqrt.pop %v615
          %618 = vset.pattern.permute.xlu0 0
          %619 = vperm.xlu0 %618, %v608
          %v620 = vpop.permute.xlu0 %619
          %v622 = vsub.f32 %v601, %v620
          %624 = vset.pattern.permute.xlu0 0
          %625 = vperm.xlu0 %624, %v616
          %v626 = vpop.permute.xlu0 %625
          %v628 = vmul.f32 %v622, %v626
          %v629 = vmax.f32 %v628, 0.0
          %v630 = vmin.f32 %v551, %v629
          %v631 = vld [vmem:[%s2] sm:$0xff]
          %v632 = vld [vmem:[%s2 + $0x8] sm:$0xff]
          %v633 = vld [vmem:[%s2 + $0x10] sm:$0xff]
          %v634 = vld [vmem:[%s2 + $0x18] sm:$0xff]
          %v635 = vld [vmem:[%s2 + $0x20] sm:$0xff]
          %v636 = vld [vmem:[%s2 + $0x28] sm:$0xff]
          %v637 = vld [vmem:[%s2 + $0x30] sm:$0xff]
          %v638 = vld [vmem:[%s2 + $0x38] sm:$0xff]
          %v639 = vld [vmem:[%s2 + $0x40] sm:$0xff]
          %v640 = vld [vmem:[%s2 + $0x48] sm:$0xff]
          %v641 = vld [vmem:[%s2 + $0x50] sm:$0xff]
          %v642 = vld [vmem:[%s2 + $0x58] sm:$0xff]
          %v643 = vld [vmem:[%s2 + $0x60] sm:$0xff]
          %v644 = vld [vmem:[%s2 + $0x68] sm:$0xff]
          %646 = vset.pattern.permute.xlu0 0
          %647 = vperm.xlu0 %646, %v631
          %v648 = vpop.permute.xlu0 %647
          %v650 = vmul.f32 %v630, %v648
          %v651 = vadd.f32 %v650, 0.0
          %653 = vset.pattern.permute.xlu0 0
          %654 = vperm.xlu0 %653, %v632
          %v655 = vpop.permute.xlu0 %654
          %v657 = vmul.f32 %v630, %v655
          %659 = vrot.lane.b32.xlu0 %v657, 126
          %v660 = vpop.permute.xlu0 %659
          %v662 = vadd.f32 %v651, %v660
          %664 = vset.pattern.permute.xlu0 0
          %665 = vperm.xlu0 %664, %v633
          %v666 = vpop.permute.xlu0 %665
          %v668 = vmul.f32 %v630, %v666
          %670 = vrot.lane.b32.xlu0 %v668, 124
          %v671 = vpop.permute.xlu0 %670
          %v673 = vadd.f32 %v662, %v671
          %675 = vset.pattern.permute.xlu0 0
          %676 = vperm.xlu0 %675, %v634
          %v677 = vpop.permute.xlu0 %676
          %v679 = vmul.f32 %v630, %v677
          %681 = vrot.lane.b32.xlu0 %v679, 122
          %v682 = vpop.permute.xlu0 %681
          %v684 = vadd.f32 %v673, %v682
          %686 = vset.pattern.permute.xlu0 0
          %687 = vperm.xlu0 %686, %v635
          %v688 = vpop.permute.xlu0 %687
          %v690 = vmul.f32 %v630, %v688
          %692 = vrot.lane.b32.xlu0 %v690, 120
          %v693 = vpop.permute.xlu0 %692
          %v695 = vadd.f32 %v684, %v693
          %697 = vset.pattern.permute.xlu0 0
          %698 = vperm.xlu0 %697, %v636
          %v699 = vpop.permute.xlu0 %698
          %v701 = vmul.f32 %v630, %v699
          %703 = vrot.lane.b32.xlu0 %v701, 118
          %v704 = vpop.permute.xlu0 %703
          %v706 = vadd.f32 %v695, %v704
          %708 = vset.pattern.permute.xlu0 0
          %709 = vperm.xlu0 %708, %v637
          %v710 = vpop.permute.xlu0 %709
          %v712 = vmul.f32 %v630, %v710
          %714 = vrot.lane.b32.xlu0 %v712, 116
          %v715 = vpop.permute.xlu0 %714
          %v717 = vadd.f32 %v706, %v715
          %719 = vset.pattern.permute.xlu0 0
          %720 = vperm.xlu0 %719, %v638
          %v721 = vpop.permute.xlu0 %720
          %v723 = vmul.f32 %v630, %v721
          %725 = vrot.lane.b32.xlu0 %v723, 114
          %v726 = vpop.permute.xlu0 %725
          %v728 = vadd.f32 %v717, %v726
          %730 = vset.pattern.permute.xlu0 0
          %731 = vperm.xlu0 %730, %v639
          %v732 = vpop.permute.xlu0 %731
          %v734 = vmul.f32 %v630, %v732
          %736 = vrot.lane.b32.xlu0 %v734, 112
          %v737 = vpop.permute.xlu0 %736
          %v739 = vadd.f32 %v728, %v737
          %741 = vset.pattern.permute.xlu0 0
          %742 = vperm.xlu0 %741, %v640
          %v743 = vpop.permute.xlu0 %742
          %v745 = vmul.f32 %v630, %v743
          %747 = vrot.lane.b32.xlu0 %v745, 110
          %v748 = vpop.permute.xlu0 %747
          %v750 = vadd.f32 %v739, %v748
          %752 = vset.pattern.permute.xlu0 0
          %753 = vperm.xlu0 %752, %v641
          %v754 = vpop.permute.xlu0 %753
          %v756 = vmul.f32 %v630, %v754
          %758 = vrot.lane.b32.xlu0 %v756, 108
          %v759 = vpop.permute.xlu0 %758
          %v761 = vadd.f32 %v750, %v759
          %763 = vset.pattern.permute.xlu0 0
          %764 = vperm.xlu0 %763, %v642
          %v765 = vpop.permute.xlu0 %764
          %v767 = vmul.f32 %v630, %v765
          %769 = vrot.lane.b32.xlu0 %v767, 106
          %v770 = vpop.permute.xlu0 %769
          %v772 = vadd.f32 %v761, %v770
          %774 = vset.pattern.permute.xlu0 0
          %775 = vperm.xlu0 %774, %v643
          %v776 = vpop.permute.xlu0 %775
          %v778 = vmul.f32 %v630, %v776
          %780 = vrot.lane.b32.xlu0 %v778, 104
          %v781 = vpop.permute.xlu0 %780
          %v783 = vadd.f32 %v772, %v781
          %785 = vset.pattern.permute.xlu0 0
          %786 = vperm.xlu0 %785, %v644
          %v787 = vpop.permute.xlu0 %786
          %v789 = vmul.f32 %v630, %v787
          %791 = vrot.lane.b32.xlu0 %v789, 102
          %v792 = vpop.permute.xlu0 %791
          %v794 = vadd.f32 %v783, %v792
          %vm795 = vcmask 15360
          %v796 = vsel %vm795, %v794, 0.0
          %v797 = vrot.slane %v796, 4
          %v798 = vadd.f32 %v796, %v797
          %v799 = vrot.slane %v798, 2
          %v800 = vadd.f32 %v798, %v799
          %v801 = vrot.slane %v800, 1
          %v802 = vadd.f32 %v800, %v801
          %vm803 = vcmask 8192
          %804 = vst.msk [vmem:[#allocation4] sm:$0x1] %vm803, %v802
        $region44: #{tpu_custom_call.1} parent=31 // pred_fallthru
          _
        // Predicated region
        $region45: #{tpu_custom_call.1} parent=31 // pred_check
          %p805 = pneg %p113
        $region46: #{tpu_custom_call.1} parent=31 // pred_check_branch
          %807 = sbr.rel (%p805) target = $region48
        $region47: #{tpu_custom_call.1} parent=31 // pred_region
          %s809 = ssub.s32 16, 16
          %810 = vsyncadd [#allocation5], %s809
          %s811 = smul.addr %s20, 16
          %s812 = scalar_lea.hbm %s3, %s811
          %s814 = sshll.u32 [#allocation4], 4
          %s815 = int_to_ptr.vmem [resolvable:$true] %s814
          %817 = dma.vmem_to_hbm [thread:$0]  %s815, 16, %s812, [#allocation5]
        $region48: #{tpu_custom_call.1} parent=31 // pred_fallthru
          _
        // Predicated region
        $region49: #{tpu_custom_call.1} parent=31 // pred_check
          %p818 = pneg %p113
        $region50: #{tpu_custom_call.1} parent=31 // pred_check_branch
          %820 = sbr.rel (%p818) target = $region52
        $region51: #{tpu_custom_call.1} parent=31 // pred_region
          %821 = dma.done [#allocation5], 16
        $region52: #{tpu_custom_call.1} parent=31 // pred_fallthru
          _
      $region32: #{tpu_custom_call.1} parent=5 // pred_fallthru
        _
      %p822 = scmp.le.s32.totalorder 2, %s10
      // Predicated region
      $region53: #{tpu_custom_call.1} parent=5 // pred_check
        %p823 = pneg %p822
      $region54: #{tpu_custom_call.1} parent=5 // pred_check_branch
        %825 = sbr.rel (%p823) target = $region56
      $region55: #{tpu_custom_call.1} parent=5 // pred_region
        %s826 = ssub.s32 %s10, 2
      $region56: #{tpu_custom_call.1} parent=5 // pred_fallthru
        _
    $region6: #{tpu_custom_call.1} parent=1 // loop_footer
      %s14 = sadd.s32 1, %s10
    $region7: #{tpu_custom_call.1} parent=1 // loop_footer_branch
      %9 = sbr.rel target = $region3
    $region8: #{tpu_custom_call.1} parent=1 // loop_exit
      _
    %827 = vsyncpa [#allocation5], 1
    %s828 = scalar_lea.sflag [#allocation5], 1
    %829 = vsyncpa %s828, 1

</llo_original>
